<compile_context>
chip_gen: v7x
topology: tpu7x:2x2x1
jax: 0.10.0
libtpu: 0.0.40
codegen_flags: <defaults>
</compile_context>

<pallas_src>
import functools

import jax
import jax.numpy as jnp
from jax import lax
from jax.experimental import pallas as pl
from jax.experimental.pallas import tpu as pltpu


# ----------------------------------------------------------------------------
# config / helpers
# ----------------------------------------------------------------------------
_VMEM_LIMIT = 48 * 1024 * 1024   # safe on v7x (64 MiB/TC physical)
_TILE_BUDGET = 36 * 1024 * 1024  # per-tile VMEM budget used to size TS/BT
_SMALL_H_MAX = 16                # VPU fast-path threshold (spec has H=4)


def _round_up(n, m):
    return ((n + m - 1) // m) * m


def _mxu_tiles(B, T, H_pad):
    """Pick (BT, TS, B_pad, T_pad) for the general (MXU) path under the budget."""
    b8 = _round_up(B, 8)

    def vmem_bytes(bt, ts):
        return 4 * (3 * ts * bt * H_pad       # xw double buffer + h_t stash
                    + 2 * H_pad * H_pad       # W_hh
                    + 5 * bt * H_pad          # h0 / hN / carry
                    + 2 * bt * ts)            # y

    # Batch tile: as large as possible (amortizes per-step MXU latency).
    if b8 <= 512 and vmem_bytes(b8, 8) <= _TILE_BUDGET:
        BT = b8
    else:
        BT = max(128, (min(b8, 512) // 128) * 128)
        while BT > 128 and vmem_bytes(BT, 8) > _TILE_BUDGET:
            BT -= 128
    B_pad = _round_up(b8, BT)
    # TODO(synk): on megacore chips, force >=2 batch tiles when B_pad >= 256.

    # Time chunk: one chunk if it fits, else a multiple of 128 (keeps the y
    # block shape legal and the xw stream double-buffered / bounded).
    t8 = _round_up(T, 8)
    if t8 <= 1024 and vmem_bytes(BT, t8) <= _TILE_BUDGET:
        TS = t8
    else:
        TS = 128
        while TS < 1024 and vmem_bytes(BT, TS + 128) <= _TILE_BUDGET:
            TS += 128
    T_pad = _round_up(T, TS)
    return BT, TS, B_pad, T_pad


def _vpu_tiles(B, T, H):
    """Pick (BLT, TS, B_lpad, T_pad) for the small-H (VPU) path."""
    bl = _round_up(B, 128)

    def vmem_bytes(blt, ts):
        return 4 * (2 * ts * H * blt          # xw double buffer
                    + (H + 1) * H * blt       # lane-broadcast W_hh + w_f
                    + 4 * H * blt             # h0 / hN / carry
                    + 2 * ts * blt)           # y

    BLT = min(bl, 1024)
    while BLT > 128 and vmem_bytes(BLT, 8) > _TILE_BUDGET:
        BLT -= 128
    B_lpad = _round_up(bl, BLT)

    t8 = _round_up(T, 8)
    if t8 <= 2048 and vmem_bytes(BLT, t8) <= _TILE_BUDGET:
        TS = t8
    else:
        TS = 128
        while TS < 2048 and vmem_bytes(BLT, TS + 128) <= _TILE_BUDGET:
            TS += 128
    T_pad = _round_up(T, TS)
    return BLT, TS, B_lpad, T_pad


# ----------------------------------------------------------------------------
# kernels
# ----------------------------------------------------------------------------
def _rnn_mxu_kernel(xw_ref, h0_ref, whh_ref, wf_ref, y_ref, hN_ref,
                    h_carry, buf_ref, *, T_total, ragged):
    """General path: h on sublanes, H_pad on lanes, recurrence on the MXU.

    h_t = relu(xw[t] + h_{t-1} @ W_hh^T);  y[t] = h_t . w_f   (batched after loop)
    """
    t_idx = pl.program_id(1)

    @pl.when(t_idx == 0)
    def _():
        h_carry[...] = h0_ref[...]

    TS = xw_ref.shape[0]
    whh = whh_ref[...]
    # TODO(synk): keep W_hh weight-stationary across the TS steps with
    # pltpu.matmul_push_rhs / matmul_acc_lhs / matmul_pop.

    def step(t, h):
        pre = xw_ref[t] + jnp.dot(h, whh, preferred_element_type=jnp.float32)
        h_new = jnp.maximum(pre, 0.0)
        buf_ref[t] = h_new                       # stash for batched projection
        if ragged:
            h_new = jnp.where(t_idx * TS + t < T_total, h_new, h)
        return h_new

    h_fin = lax.fori_loop(0, TS, step, h_carry[...], unroll=min(TS, 8))
    h_carry[...] = h_fin

    @pl.when(t_idx == pl.num_programs(1) - 1)
    def _():
        hN_ref[...] = h_fin

    # Batched output projection (off the serial path): (TS, BT) slab.
    wf = wf_ref[...].reshape(1, 1, -1)
    y_ref[...] = jnp.sum(buf_ref[...] * wf, axis=-1)


def _rnn_vpu_kernel(xw_ref, h0_ref, whhb_ref, wfb_ref, y_ref, hN_ref,
                    h_carry, *, T_total, ragged):
    """Tiny-H fast path: h kept as (H, batch-on-lanes); each step is H
    broadcast-FMAs on the VPU (no MXU latency on the serial path)."""
    t_idx = pl.program_id(1)

    @pl.when(t_idx == 0)
    def _():
        h_carry[...] = h0_ref[...]

    TS, H, _ = xw_ref.shape
    whhb = whhb_ref[...]          # (H_k, H_j, BLT): whhb[k, j, :] == W_hh[j, k]
    wfb = wfb_ref[...]            # (H, BLT):        wfb[j, :]    == w_f[j]

    def step(t, h):
        pre = xw_ref[t]                                   # (H, BLT)
        for k in range(H):                                # static unroll, VPU only
            pre = pre + whhb[k] * h[k:k + 1, :]
        h_new = jnp.maximum(pre, 0.0)
        if ragged:
            h_new = jnp.where(t_idx * TS + t < T_total, h_new, h)
        # per-step output projection (lane-dense row store)
        y_t = wfb[0:1, :] * h_new[0:1, :]
        for j in range(1, H):
            y_t = y_t + wfb[j:j + 1, :] * h_new[j:j + 1, :]
        y_ref[pl.ds(t, 1), :] = y_t
        return h_new

    h_fin = lax.fori_loop(0, TS, step, h_carry[...], unroll=min(TS, 8))
    h_carry[...] = h_fin

    @pl.when(t_idx == pl.num_programs(1) - 1)
    def _():
        hN_ref[...] = h_fin


# ----------------------------------------------------------------------------
# pallas_call wrappers
# ----------------------------------------------------------------------------
def _forward_mxu(xw, h0, w_hh, w_f, B, T, H):
    H_pad = _round_up(H, 128)
    BT, TS, B_pad, T_pad = _mxu_tiles(B, T, H_pad)

    xw_t = jnp.transpose(xw, (1, 0, 2))                                    # (T, B, H)
    xw_t = jnp.pad(xw_t, ((0, T_pad - T), (0, B_pad - B), (0, H_pad - H)))
    h0_p = jnp.pad(h0, ((0, B_pad - B), (0, H_pad - H)))
    whh = jnp.pad(w_hh.T, ((0, H_pad - H), (0, H_pad - H)))
    wf = jnp.pad(w_f.reshape(1, H), ((0, 0), (0, H_pad - H)))

    grid = (B_pad // BT, T_pad // TS)
    ragged = T_pad != T
    kernel = functools.partial(_rnn_mxu_kernel, T_total=T, ragged=ragged)

    flops = 2 * T * B_pad * H_pad * (H_pad + 1)
    bytes_accessed = 4 * (xw_t.size + h0_p.size + whh.size + wf.size
                          + T_pad * B_pad + B_pad * H_pad)

    y_pad, hN_pad = pl.pallas_call(
        kernel,
        out_shape=(jax.ShapeDtypeStruct((T_pad, B_pad), jnp.float32),
                   jax.ShapeDtypeStruct((B_pad, H_pad), jnp.float32)),
        grid=grid,
        in_specs=[
            pl.BlockSpec((TS, BT, H_pad), lambda b, t: (t, b, 0)),   # xw stream
            pl.BlockSpec((BT, H_pad), lambda b, t: (b, 0)),          # h0
            pl.BlockSpec((H_pad, H_pad), lambda b, t: (0, 0)),       # W_hh^T
            pl.BlockSpec((1, H_pad), lambda b, t: (0, 0)),           # w_f
        ],
        out_specs=(
            pl.BlockSpec((TS, BT), lambda b, t: (t, b)),             # y
            pl.BlockSpec((BT, H_pad), lambda b, t: (b, 0)),          # h_N (resident)
        ),
        scratch_shapes=[
            pltpu.VMEM((BT, H_pad), jnp.float32),                    # carried h
            pltpu.VMEM((TS, BT, H_pad), jnp.float32),                # h_t stash
        ],
        compiler_params=pltpu.CompilerParams(
            dimension_semantics=("parallel", "arbitrary"),
            vmem_limit_bytes=_VMEM_LIMIT),
        cost_estimate=pl.CostEstimate(flops=flops, transcendentals=0,
                                      bytes_accessed=bytes_accessed),
    )(xw_t, h0_p, whh, wf)

    return y_pad[:T, :B].T, hN_pad[:B, :H]


def _forward_vpu(xw, h0, w_hh, w_f, B, T, H):
    BLT, TS, B_lpad, T_pad = _vpu_tiles(B, T, H)

    xw_t = jnp.transpose(xw, (1, 2, 0))                                    # (T, H, B)
    xw_t = jnp.pad(xw_t, ((0, T_pad - T), (0, 0), (0, B_lpad - B)))
    h0_t = jnp.pad(h0.T, ((0, 0), (0, B_lpad - B)))                        # (H, B_lpad)
    # Pre-broadcast W_hh / w_f over the lane axis (tiny: H<=16) so the kernel
    # only does elementwise FMAs — no in-kernel lane broadcasts needed.
    whhb = jnp.broadcast_to(w_hh.T[:, :, None], (H, H, BLT))
    wfb = jnp.broadcast_to(w_f.reshape(H, 1), (H, BLT))

    grid = (B_lpad // BLT, T_pad // TS)
    ragged = T_pad != T
    kernel = functools.partial(_rnn_vpu_kernel, T_total=T, ragged=ragged)

    flops = 2 * T * B_lpad * H * (H + 1)
    bytes_accessed = 4 * (xw_t.size + h0_t.size + whhb.size + wfb.size
                          + T_pad * B_lpad + H * B_lpad)

    y_pad, hN_pad = pl.pallas_call(
        kernel,
        out_shape=(jax.ShapeDtypeStruct((T_pad, B_lpad), jnp.float32),
                   jax.ShapeDtypeStruct((H, B_lpad), jnp.float32)),
        grid=grid,
        in_specs=[
            pl.BlockSpec((TS, H, BLT), lambda b, t: (t, 0, b)),      # xw stream
            pl.BlockSpec((H, BLT), lambda b, t: (0, b)),             # h0
            pl.BlockSpec((H, H, BLT), lambda b, t: (0, 0, 0)),       # W_hh (bcast)
            pl.BlockSpec((H, BLT), lambda b, t: (0, 0)),             # w_f (bcast)
        ],
        out_specs=(
            pl.BlockSpec((TS, BLT), lambda b, t: (t, b)),            # y (lane-dense)
            pl.BlockSpec((H, BLT), lambda b, t: (0, b)),             # h_N (resident)
        ),
        scratch_shapes=[pltpu.VMEM((H, BLT), jnp.float32)],          # carried h
        compiler_params=pltpu.CompilerParams(
            dimension_semantics=("parallel", "arbitrary"),
            vmem_limit_bytes=_VMEM_LIMIT),
        cost_estimate=pl.CostEstimate(flops=flops, transcendentals=0,
                                      bytes_accessed=bytes_accessed),
    )(xw_t, h0_t, whhb, wfb)

    return y_pad[:T, :B].T, hN_pad[:, :B].T


@jax.jit
def rnn_forward(x, h, params):
    """x: (B, T, I) float32 (batch_first), h: (1, B, H) float32."""
    B, T, _ = x.shape
    H = h.shape[-1]

    w_ih, w_hh = params["w_ih"], params["w_hh"]
    bias = params["b_ih"] + params["b_hh"]
    w_f = params["w_f"].reshape(H)
    b_f = params["b_f"].reshape(())

    # Hoisted input projection: one big XLA matmul; the kernel only streams xw.
    xw = jnp.einsum("bti,hi->bth", x, w_ih) + bias                   # (B, T, H)

    if H <= _SMALL_H_MAX:
        y, hN = _forward_vpu(xw, h[0], w_hh, w_f, B, T, H)
    else:
        y, hN = _forward_mxu(xw, h[0], w_hh, w_f, B, T, H)

    y = y + b_f                                   # final Linear bias, off-kernel
    return y[:, :, None], hN[None]


# ----------------------------------------------------------------------------
# params / reference / self-test
# ----------------------------------------------------------------------------
def init_params(key, input_size, hidden_size):
    """Deterministic init mimicking PyTorch's uniform(-1/sqrt(H), 1/sqrt(H))."""
    k = 1.0 / jnp.sqrt(jnp.float32(hidden_size))
    keys = jax.random.split(key, 6)
    u = lambda kk, shape: jax.random.uniform(kk, shape, jnp.float32, -k, k)
    return {
        "w_ih": u(keys[0], (hidden_size, input_size)),
        "w_hh": u(keys[1], (hidden_size, hidden_size)),
        "b_ih": u(keys[2], (hidden_size,)),
        "b_hh": u(keys[3], (hidden_size,)),
        "w_f":  u(keys[4], (1, hidden_size)),
        "b_f":  u(keys[5], (1,)),
    }


def rnn_reference(x, h, params):
    """Pure-JAX reference of the PyTorch forward pass."""
    w_ih, w_hh = params["w_ih"], params["w_hh"]
    b_ih, b_hh = params["b_ih"], params["b_hh"]
    w_f, b_f = params["w_f"], params["b_f"]

    def step(h_prev, x_t):
        h_new = jax.nn.relu(x_t @ w_ih.T + b_ih + h_prev @ w_hh.T + b_hh)
        return h_new, h_new

    h_final, hs = lax.scan(step, h[0], jnp.transpose(x, (1, 0, 2)))
    hs = jnp.transpose(hs, (1, 0, 2))        # (B, T, H)
    y = hs @ w_f.T + b_f                     # (B, T, 1)
    return y, h_final[None]


if __name__ == "__main__":
    # Spec shapes: nn.RNN(input_size=1, hidden_size=4, relu, batch_first) + Linear(4, 1)
    hidden_size, input_size, batch, seq = 4, 1, 2, 8

    key = jax.random.PRNGKey(0)
    k_x, k_h, k_p = jax.random.split(key, 3)
    x = jax.random.normal(k_x, (batch, seq, input_size), jnp.float32)
    h = jax.random.normal(k_h, (1, batch, hidden_size), jnp.float32)
    params = init_params(k_p, input_size, hidden_size)

    y, h_out = rnn_forward(x, h, params)
    jax.block_until_ready((y, h_out))

    y_ref, h_ref = rnn_reference(x, h, params)
    assert y.shape == (batch, seq, 1)
    assert h_out.shape == (1, batch, hidden_size)
    assert jnp.allclose(y, y_ref, atol=1e-5, rtol=1e-5)
    assert jnp.allclose(h_out, h_ref, atol=1e-5, rtol=1e-5)

    # Secondary check exercising the general MXU path (H >= 128, ragged T).
    hs2, is2, b2, t2 = 128, 8, 16, 30
    k_x2, k_h2, k_p2 = jax.random.split(jax.random.PRNGKey(1), 3)
    x2 = jax.random.normal(k_x2, (b2, t2, is2), jnp.float32)
    h2 = jax.random.normal(k_h2, (1, b2, hs2), jnp.float32)
    params2 = init_params(k_p2, is2, hs2)

    y2, h2_out = rnn_forward(x2, h2, params2)
    jax.block_until_ready((y2, h2_out))
    y2_ref, h2_ref = rnn_reference(x2, h2, params2)
    assert jnp.allclose(y2, y2_ref, atol=2e-4, rtol=2e-4)
    assert jnp.allclose(h2_out, h2_ref, atol=2e-4, rtol=2e-4)

    print("KERNEL_OK")
</pallas_src>

<mosaic_0001>
module attributes {stable_mosaic.version = 11 : i64} {
  func.func @_rnn_vpu_kernel(%arg0: i32, %arg1: i32, %arg2: memref<8x4x128xf32, #tpu.memory_space<vmem>>, %arg3: memref<4x128xf32, #tpu.memory_space<vmem>>, %arg4: memref<4x4x128xf32, #tpu.memory_space<vmem>>, %arg5: memref<4x128xf32, #tpu.memory_space<vmem>>, %arg6: memref<8x128xf32, #tpu.memory_space<vmem>>, %arg7: memref<4x128xf32, #tpu.memory_space<vmem>>, %arg8: memref<4x128xf32, #tpu.memory_space<vmem>>) attributes {dimension_semantics = [#tpu.dimension_semantics<parallel>, #tpu.dimension_semantics<arbitrary>], iteration_bounds = array<i64: 1, 1>, scalar_prefetch = 0 : i64, scratch_operands = 1 : i64, tpu.core_type = #tpu.core_type<tc>, window_params = [{transform_indices = @transform_0, window_bounds = array<i64: 8, 4, 128>}, {transform_indices = @transform_1, window_bounds = array<i64: 4, 128>}, {pipeline_mode = #tpu.pipeline_mode<synchronous>, transform_indices = @transform_2, window_bounds = array<i64: 4, 4, 128>}, {pipeline_mode = #tpu.pipeline_mode<synchronous>, transform_indices = @transform_3, window_bounds = array<i64: 4, 128>}, {transform_indices = @transform_4, window_bounds = array<i64: 8, 128>}, {transform_indices = @transform_5, window_bounds = array<i64: 4, 128>}]} {
    %c0_i32 = arith.constant 0 : i32
    %0 = arith.cmpi eq, %arg1, %c0_i32 : i32
    %1 = arith.extui %0 : i1 to i32
    %c0_i32_0 = arith.constant 0 : i32
    %2 = arith.cmpi ne, %1, %c0_i32_0 : i32
    scf.if %2 {
      %c0_43 = arith.constant 0 : index
      %c0_44 = arith.constant 0 : index
      %378 = vector.load %arg3[%c0_43, %c0_44] : memref<4x128xf32, #tpu.memory_space<vmem>>, vector<4x128xf32>
      %c0_45 = arith.constant 0 : index
      %c0_46 = arith.constant 0 : index
      %379 = vector.load %arg8[%c0_45, %c0_46] : memref<4x128xf32, #tpu.memory_space<vmem>>, vector<4x128xf32>
      tpu.vector_store %arg8[%c0_45, %c0_46], %378 {strides = array<i32>} : memref<4x128xf32, #tpu.memory_space<vmem>>, vector<4x128xf32>,
    } else {
    }
    %c0 = arith.constant 0 : index
    %c0_1 = arith.constant 0 : index
    %c0_2 = arith.constant 0 : index
    %3 = vector.load %arg4[%c0, %c0_1, %c0_2] : memref<4x4x128xf32, #tpu.memory_space<vmem>>, vector<4x4x128xf32>
    %c0_3 = arith.constant 0 : index
    %c0_4 = arith.constant 0 : index
    %4 = vector.load %arg5[%c0_3, %c0_4] : memref<4x128xf32, #tpu.memory_space<vmem>>, vector<4x128xf32>
    %c0_5 = arith.constant 0 : index
    %c0_6 = arith.constant 0 : index
    %5 = vector.load %arg8[%c0_5, %c0_6] : memref<4x128xf32, #tpu.memory_space<vmem>>, vector<4x128xf32>
    %c0_i32_7 = arith.constant 0 : i32
    %6 = arith.index_cast %c0_i32_7 : i32 to index
    %c0_8 = arith.constant 0 : index
    %c0_9 = arith.constant 0 : index
    %7 = vector.load %arg2[%6, %c0_8, %c0_9] : memref<8x4x128xf32, #tpu.memory_space<vmem>>, vector<1x4x128xf32>
    %8 = vector.shape_cast %7 : vector<1x4x128xf32> to vector<4x128xf32>
    %9 = vector.extract_strided_slice %3 {offsets = [0, 0, 0], sizes = [1, 4, 128], strides = [1, 1, 1]} : vector<4x4x128xf32> to vector<1x4x128xf32>
    %10 = vector.shape_cast %9 : vector<1x4x128xf32> to vector<4x128xf32>
    %11 = vector.extract_strided_slice %5 {offsets = [0, 0], sizes = [1, 128], strides = [1, 1]} : vector<4x128xf32> to vector<1x128xf32>
    %12 = vector.broadcast %11 : vector<1x128xf32> to vector<4x128xf32>
    %13 = arith.mulf %10, %12 : vector<4x128xf32>
    %14 = arith.addf %8, %13 : vector<4x128xf32>
    %15 = vector.extract_strided_slice %3 {offsets = [1, 0, 0], sizes = [1, 4, 128], strides = [1, 1, 1]} : vector<4x4x128xf32> to vector<1x4x128xf32>
    %16 = vector.shape_cast %15 : vector<1x4x128xf32> to vector<4x128xf32>
    %17 = vector.extract_strided_slice %5 {offsets = [1, 0], sizes = [1, 128], strides = [1, 1]} : vector<4x128xf32> to vector<1x128xf32>
    %18 = vector.broadcast %17 : vector<1x128xf32> to vector<4x128xf32>
    %19 = arith.mulf %16, %18 : vector<4x128xf32>
    %20 = arith.addf %14, %19 : vector<4x128xf32>
    %21 = vector.extract_strided_slice %3 {offsets = [2, 0, 0], sizes = [1, 4, 128], strides = [1, 1, 1]} : vector<4x4x128xf32> to vector<1x4x128xf32>
    %22 = vector.shape_cast %21 : vector<1x4x128xf32> to vector<4x128xf32>
    %23 = vector.extract_strided_slice %5 {offsets = [2, 0], sizes = [1, 128], strides = [1, 1]} : vector<4x128xf32> to vector<1x128xf32>
    %24 = vector.broadcast %23 : vector<1x128xf32> to vector<4x128xf32>
    %25 = arith.mulf %22, %24 : vector<4x128xf32>
    %26 = arith.addf %20, %25 : vector<4x128xf32>
    %27 = vector.extract_strided_slice %3 {offsets = [3, 0, 0], sizes = [1, 4, 128], strides = [1, 1, 1]} : vector<4x4x128xf32> to vector<1x4x128xf32>
    %28 = vector.shape_cast %27 : vector<1x4x128xf32> to vector<4x128xf32>
    %29 = vector.extract_strided_slice %5 {offsets = [3, 0], sizes = [1, 128], strides = [1, 1]} : vector<4x128xf32> to vector<1x128xf32>
    %30 = vector.broadcast %29 : vector<1x128xf32> to vector<4x128xf32>
    %31 = arith.mulf %28, %30 : vector<4x128xf32>
    %32 = arith.addf %26, %31 : vector<4x128xf32>
    %cst = arith.constant 0.000000e+00 : f32
    %33 = vector.broadcast %cst : f32 to vector<4x128xf32>
    %34 = arith.maximumf %32, %33 : vector<4x128xf32>
    %35 = vector.extract_strided_slice %4 {offsets = [0, 0], sizes = [1, 128], strides = [1, 1]} : vector<4x128xf32> to vector<1x128xf32>
    %36 = vector.extract_strided_slice %34 {offsets = [0, 0], sizes = [1, 128], strides = [1, 1]} : vector<4x128xf32> to vector<1x128xf32>
    %37 = arith.mulf %35, %36 : vector<1x128xf32>
    %38 = vector.extract_strided_slice %4 {offsets = [1, 0], sizes = [1, 128], strides = [1, 1]} : vector<4x128xf32> to vector<1x128xf32>
    %39 = vector.extract_strided_slice %34 {offsets = [1, 0], sizes = [1, 128], strides = [1, 1]} : vector<4x128xf32> to vector<1x128xf32>
    %40 = arith.mulf %38, %39 : vector<1x128xf32>
    %41 = arith.addf %37, %40 : vector<1x128xf32>
    %42 = vector.extract_strided_slice %4 {offsets = [2, 0], sizes = [1, 128], strides = [1, 1]} : vector<4x128xf32> to vector<1x128xf32>
    %43 = vector.extract_strided_slice %34 {offsets = [2, 0], sizes = [1, 128], strides = [1, 1]} : vector<4x128xf32> to vector<1x128xf32>
    %44 = arith.mulf %42, %43 : vector<1x128xf32>
    %45 = arith.addf %41, %44 : vector<1x128xf32>
    %46 = vector.extract_strided_slice %4 {offsets = [3, 0], sizes = [1, 128], strides = [1, 1]} : vector<4x128xf32> to vector<1x128xf32>
    %47 = vector.extract_strided_slice %34 {offsets = [3, 0], sizes = [1, 128], strides = [1, 1]} : vector<4x128xf32> to vector<1x128xf32>
    %48 = arith.mulf %46, %47 : vector<1x128xf32>
    %49 = arith.addf %45, %48 : vector<1x128xf32>
    %50 = arith.index_cast %c0_i32_7 : i32 to index
    %c0_10 = arith.constant 0 : index
    %51 = vector.load %arg6[%50, %c0_10] : memref<8x128xf32, #tpu.memory_space<vmem>>, vector<1x128xf32>
    tpu.vector_store %arg6[%50, %c0_10], %49 {strides = array<i32>} : memref<8x128xf32, #tpu.memory_space<vmem>>, vector<1x128xf32>,
    %c1_i32 = arith.constant 1 : i32
    %52 = arith.index_cast %c1_i32 : i32 to index
    %c0_11 = arith.constant 0 : index
    %c0_12 = arith.constant 0 : index
    %53 = vector.load %arg2[%52, %c0_11, %c0_12] : memref<8x4x128xf32, #tpu.memory_space<vmem>>, vector<1x4x128xf32>
    %54 = vector.shape_cast %53 : vector<1x4x128xf32> to vector<4x128xf32>
    %55 = vector.extract_strided_slice %3 {offsets = [0, 0, 0], sizes = [1, 4, 128], strides = [1, 1, 1]} : vector<4x4x128xf32> to vector<1x4x128xf32>
    %56 = vector.shape_cast %55 : vector<1x4x128xf32> to vector<4x128xf32>
    %57 = vector.extract_strided_slice %34 {offsets = [0, 0], sizes = [1, 128], strides = [1, 1]} : vector<4x128xf32> to vector<1x128xf32>
    %58 = vector.broadcast %57 : vector<1x128xf32> to vector<4x128xf32>
    %59 = arith.mulf %56, %58 : vector<4x128xf32>
    %60 = arith.addf %54, %59 : vector<4x128xf32>
    %61 = vector.extract_strided_slice %3 {offsets = [1, 0, 0], sizes = [1, 4, 128], strides = [1, 1, 1]} : vector<4x4x128xf32> to vector<1x4x128xf32>
    %62 = vector.shape_cast %61 : vector<1x4x128xf32> to vector<4x128xf32>
    %63 = vector.extract_strided_slice %34 {offsets = [1, 0], sizes = [1, 128], strides = [1, 1]} : vector<4x128xf32> to vector<1x128xf32>
    %64 = vector.broadcast %63 : vector<1x128xf32> to vector<4x128xf32>
    %65 = arith.mulf %62, %64 : vector<4x128xf32>
    %66 = arith.addf %60, %65 : vector<4x128xf32>
    %67 = vector.extract_strided_slice %3 {offsets = [2, 0, 0], sizes = [1, 4, 128], strides = [1, 1, 1]} : vector<4x4x128xf32> to vector<1x4x128xf32>
    %68 = vector.shape_cast %67 : vector<1x4x128xf32> to vector<4x128xf32>
    %69 = vector.extract_strided_slice %34 {offsets = [2, 0], sizes = [1, 128], strides = [1, 1]} : vector<4x128xf32> to vector<1x128xf32>
    %70 = vector.broadcast %69 : vector<1x128xf32> to vector<4x128xf32>
    %71 = arith.mulf %68, %70 : vector<4x128xf32>
    %72 = arith.addf %66, %71 : vector<4x128xf32>
    %73 = vector.extract_strided_slice %3 {offsets = [3, 0, 0], sizes = [1, 4, 128], strides = [1, 1, 1]} : vector<4x4x128xf32> to vector<1x4x128xf32>
    %74 = vector.shape_cast %73 : vector<1x4x128xf32> to vector<4x128xf32>
    %75 = vector.extract_strided_slice %34 {offsets = [3, 0], sizes = [1, 128], strides = [1, 1]} : vector<4x128xf32> to vector<1x128xf32>
    %76 = vector.broadcast %75 : vector<1x128xf32> to vector<4x128xf32>
    %77 = arith.mulf %74, %76 : vector<4x128xf32>
    %78 = arith.addf %72, %77 : vector<4x128xf32>
    %cst_13 = arith.constant 0.000000e+00 : f32
    %79 = vector.broadcast %cst_13 : f32 to vector<4x128xf32>
    %80 = arith.maximumf %78, %79 : vector<4x128xf32>
    %81 = vector.extract_strided_slice %4 {offsets = [0, 0], sizes = [1, 128], strides = [1, 1]} : vector<4x128xf32> to vector<1x128xf32>
    %82 = vector.extract_strided_slice %80 {offsets = [0, 0], sizes = [1, 128], strides = [1, 1]} : vector<4x128xf32> to vector<1x128xf32>
    %83 = arith.mulf %81, %82 : vector<1x128xf32>
    %84 = vector.extract_strided_slice %4 {offsets = [1, 0], sizes = [1, 128], strides = [1, 1]} : vector<4x128xf32> to vector<1x128xf32>
    %85 = vector.extract_strided_slice %80 {offsets = [1, 0], sizes = [1, 128], strides = [1, 1]} : vector<4x128xf32> to vector<1x128xf32>
    %86 = arith.mulf %84, %85 : vector<1x128xf32>
    %87 = arith.addf %83, %86 : vector<1x128xf32>
    %88 = vector.extract_strided_slice %4 {offsets = [2, 0], sizes = [1, 128], strides = [1, 1]} : vector<4x128xf32> to vector<1x128xf32>
    %89 = vector.extract_strided_slice %80 {offsets = [2, 0], sizes = [1, 128], strides = [1, 1]} : vector<4x128xf32> to vector<1x128xf32>
    %90 = arith.mulf %88, %89 : vector<1x128xf32>
    %91 = arith.addf %87, %90 : vector<1x128xf32>
    %92 = vector.extract_strided_slice %4 {offsets = [3, 0], sizes = [1, 128], strides = [1, 1]} : vector<4x128xf32> to vector<1x128xf32>
    %93 = vector.extract_strided_slice %80 {offsets = [3, 0], sizes = [1, 128], strides = [1, 1]} : vector<4x128xf32> to vector<1x128xf32>
    %94 = arith.mulf %92, %93 : vector<1x128xf32>
    %95 = arith.addf %91, %94 : vector<1x128xf32>
    %96 = arith.index_cast %c1_i32 : i32 to index
    %c0_14 = arith.constant 0 : index
    %97 = vector.load %arg6[%96, %c0_14] : memref<8x128xf32, #tpu.memory_space<vmem>>, vector<1x128xf32>
    tpu.vector_store %arg6[%96, %c0_14], %95 {strides = array<i32>} : memref<8x128xf32, #tpu.memory_space<vmem>>, vector<1x128xf32>,
    %c2_i32 = arith.constant 2 : i32
    %98 = arith.index_cast %c2_i32 : i32 to index
    %c0_15 = arith.constant 0 : index
    %c0_16 = arith.constant 0 : index
    %99 = vector.load %arg2[%98, %c0_15, %c0_16] : memref<8x4x128xf32, #tpu.memory_space<vmem>>, vector<1x4x128xf32>
    %100 = vector.shape_cast %99 : vector<1x4x128xf32> to vector<4x128xf32>
    %101 = vector.extract_strided_slice %3 {offsets = [0, 0, 0], sizes = [1, 4, 128], strides = [1, 1, 1]} : vector<4x4x128xf32> to vector<1x4x128xf32>
    %102 = vector.shape_cast %101 : vector<1x4x128xf32> to vector<4x128xf32>
    %103 = vector.extract_strided_slice %80 {offsets = [0, 0], sizes = [1, 128], strides = [1, 1]} : vector<4x128xf32> to vector<1x128xf32>
    %104 = vector.broadcast %103 : vector<1x128xf32> to vector<4x128xf32>
    %105 = arith.mulf %102, %104 : vector<4x128xf32>
    %106 = arith.addf %100, %105 : vector<4x128xf32>
    %107 = vector.extract_strided_slice %3 {offsets = [1, 0, 0], sizes = [1, 4, 128], strides = [1, 1, 1]} : vector<4x4x128xf32> to vector<1x4x128xf32>
    %108 = vector.shape_cast %107 : vector<1x4x128xf32> to vector<4x128xf32>
    %109 = vector.extract_strided_slice %80 {offsets = [1, 0], sizes = [1, 128], strides = [1, 1]} : vector<4x128xf32> to vector<1x128xf32>
    %110 = vector.broadcast %109 : vector<1x128xf32> to vector<4x128xf32>
    %111 = arith.mulf %108, %110 : vector<4x128xf32>
    %112 = arith.addf %106, %111 : vector<4x128xf32>
    %113 = vector.extract_strided_slice %3 {offsets = [2, 0, 0], sizes = [1, 4, 128], strides = [1, 1, 1]} : vector<4x4x128xf32> to vector<1x4x128xf32>
    %114 = vector.shape_cast %113 : vector<1x4x128xf32> to vector<4x128xf32>
    %115 = vector.extract_strided_slice %80 {offsets = [2, 0], sizes = [1, 128], strides = [1, 1]} : vector<4x128xf32> to vector<1x128xf32>
    %116 = vector.broadcast %115 : vector<1x128xf32> to vector<4x128xf32>
    %117 = arith.mulf %114, %116 : vector<4x128xf32>
    %118 = arith.addf %112, %117 : vector<4x128xf32>
    %119 = vector.extract_strided_slice %3 {offsets = [3, 0, 0], sizes = [1, 4, 128], strides = [1, 1, 1]} : vector<4x4x128xf32> to vector<1x4x128xf32>
    %120 = vector.shape_cast %119 : vector<1x4x128xf32> to vector<4x128xf32>
    %121 = vector.extract_strided_slice %80 {offsets = [3, 0], sizes = [1, 128], strides = [1, 1]} : vector<4x128xf32> to vector<1x128xf32>
    %122 = vector.broadcast %121 : vector<1x128xf32> to vector<4x128xf32>
    %123 = arith.mulf %120, %122 : vector<4x128xf32>
    %124 = arith.addf %118, %123 : vector<4x128xf32>
    %cst_17 = arith.constant 0.000000e+00 : f32
    %125 = vector.broadcast %cst_17 : f32 to vector<4x128xf32>
    %126 = arith.maximumf %124, %125 : vector<4x128xf32>
    %127 = vector.extract_strided_slice %4 {offsets = [0, 0], sizes = [1, 128], strides = [1, 1]} : vector<4x128xf32> to vector<1x128xf32>
    %128 = vector.extract_strided_slice %126 {offsets = [0, 0], sizes = [1, 128], strides = [1, 1]} : vector<4x128xf32> to vector<1x128xf32>
    %129 = arith.mulf %127, %128 : vector<1x128xf32>
    %130 = vector.extract_strided_slice %4 {offsets = [1, 0], sizes = [1, 128], strides = [1, 1]} : vector<4x128xf32> to vector<1x128xf32>
    %131 = vector.extract_strided_slice %126 {offsets = [1, 0], sizes = [1, 128], strides = [1, 1]} : vector<4x128xf32> to vector<1x128xf32>
    %132 = arith.mulf %130, %131 : vector<1x128xf32>
    %133 = arith.addf %129, %132 : vector<1x128xf32>
    %134 = vector.extract_strided_slice %4 {offsets = [2, 0], sizes = [1, 128], strides = [1, 1]} : vector<4x128xf32> to vector<1x128xf32>
    %135 = vector.extract_strided_slice %126 {offsets = [2, 0], sizes = [1, 128], strides = [1, 1]} : vector<4x128xf32> to vector<1x128xf32>
    %136 = arith.mulf %134, %135 : vector<1x128xf32>
    %137 = arith.addf %133, %136 : vector<1x128xf32>
    %138 = vector.extract_strided_slice %4 {offsets = [3, 0], sizes = [1, 128], strides = [1, 1]} : vector<4x128xf32> to vector<1x128xf32>
    %139 = vector.extract_strided_slice %126 {offsets = [3, 0], sizes = [1, 128], strides = [1, 1]} : vector<4x128xf32> to vector<1x128xf32>
    %140 = arith.mulf %138, %139 : vector<1x128xf32>
    %141 = arith.addf %137, %140 : vector<1x128xf32>
    %142 = arith.index_cast %c2_i32 : i32 to index
    %c0_18 = arith.constant 0 : index
    %143 = vector.load %arg6[%142, %c0_18] : memref<8x128xf32, #tpu.memory_space<vmem>>, vector<1x128xf32>
    tpu.vector_store %arg6[%142, %c0_18], %141 {strides = array<i32>} : memref<8x128xf32, #tpu.memory_space<vmem>>, vector<1x128xf32>,
    %c3_i32 = arith.constant 3 : i32
    %144 = arith.index_cast %c3_i32 : i32 to index
    %c0_19 = arith.constant 0 : index
    %c0_20 = arith.constant 0 : index
    %145 = vector.load %arg2[%144, %c0_19, %c0_20] : memref<8x4x128xf32, #tpu.memory_space<vmem>>, vector<1x4x128xf32>
    %146 = vector.shape_cast %145 : vector<1x4x128xf32> to vector<4x128xf32>
    %147 = vector.extract_strided_slice %3 {offsets = [0, 0, 0], sizes = [1, 4, 128], strides = [1, 1, 1]} : vector<4x4x128xf32> to vector<1x4x128xf32>
    %148 = vector.shape_cast %147 : vector<1x4x128xf32> to vector<4x128xf32>
    %149 = vector.extract_strided_slice %126 {offsets = [0, 0], sizes = [1, 128], strides = [1, 1]} : vector<4x128xf32> to vector<1x128xf32>
    %150 = vector.broadcast %149 : vector<1x128xf32> to vector<4x128xf32>
    %151 = arith.mulf %148, %150 : vector<4x128xf32>
    %152 = arith.addf %146, %151 : vector<4x128xf32>
    %153 = vector.extract_strided_slice %3 {offsets = [1, 0, 0], sizes = [1, 4, 128], strides = [1, 1, 1]} : vector<4x4x128xf32> to vector<1x4x128xf32>
    %154 = vector.shape_cast %153 : vector<1x4x128xf32> to vector<4x128xf32>
    %155 = vector.extract_strided_slice %126 {offsets = [1, 0], sizes = [1, 128], strides = [1, 1]} : vector<4x128xf32> to vector<1x128xf32>
    %156 = vector.broadcast %155 : vector<1x128xf32> to vector<4x128xf32>
    %157 = arith.mulf %154, %156 : vector<4x128xf32>
    %158 = arith.addf %152, %157 : vector<4x128xf32>
    %159 = vector.extract_strided_slice %3 {offsets = [2, 0, 0], sizes = [1, 4, 128], strides = [1, 1, 1]} : vector<4x4x128xf32> to vector<1x4x128xf32>
    %160 = vector.shape_cast %159 : vector<1x4x128xf32> to vector<4x128xf32>
    %161 = vector.extract_strided_slice %126 {offsets = [2, 0], sizes = [1, 128], strides = [1, 1]} : vector<4x128xf32> to vector<1x128xf32>
    %162 = vector.broadcast %161 : vector<1x128xf32> to vector<4x128xf32>
    %163 = arith.mulf %160, %162 : vector<4x128xf32>
    %164 = arith.addf %158, %163 : vector<4x128xf32>
    %165 = vector.extract_strided_slice %3 {offsets = [3, 0, 0], sizes = [1, 4, 128], strides = [1, 1, 1]} : vector<4x4x128xf32> to vector<1x4x128xf32>
    %166 = vector.shape_cast %165 : vector<1x4x128xf32> to vector<4x128xf32>
    %167 = vector.extract_strided_slice %126 {offsets = [3, 0], sizes = [1, 128], strides = [1, 1]} : vector<4x128xf32> to vector<1x128xf32>
    %168 = vector.broadcast %167 : vector<1x128xf32> to vector<4x128xf32>
    %169 = arith.mulf %166, %168 : vector<4x128xf32>
    %170 = arith.addf %164, %169 : vector<4x128xf32>
    %cst_21 = arith.constant 0.000000e+00 : f32
    %171 = vector.broadcast %cst_21 : f32 to vector<4x128xf32>
    %172 = arith.maximumf %170, %171 : vector<4x128xf32>
    %173 = vector.extract_strided_slice %4 {offsets = [0, 0], sizes = [1, 128], strides = [1, 1]} : vector<4x128xf32> to vector<1x128xf32>
    %174 = vector.extract_strided_slice %172 {offsets = [0, 0], sizes = [1, 128], strides = [1, 1]} : vector<4x128xf32> to vector<1x128xf32>
    %175 = arith.mulf %173, %174 : vector<1x128xf32>
    %176 = vector.extract_strided_slice %4 {offsets = [1, 0], sizes = [1, 128], strides = [1, 1]} : vector<4x128xf32> to vector<1x128xf32>
    %177 = vector.extract_strided_slice %172 {offsets = [1, 0], sizes = [1, 128], strides = [1, 1]} : vector<4x128xf32> to vector<1x128xf32>
    %178 = arith.mulf %176, %177 : vector<1x128xf32>
    %179 = arith.addf %175, %178 : vector<1x128xf32>
    %180 = vector.extract_strided_slice %4 {offsets = [2, 0], sizes = [1, 128], strides = [1, 1]} : vector<4x128xf32> to vector<1x128xf32>
    %181 = vector.extract_strided_slice %172 {offsets = [2, 0], sizes = [1, 128], strides = [1, 1]} : vector<4x128xf32> to vector<1x128xf32>
    %182 = arith.mulf %180, %181 : vector<1x128xf32>
    %183 = arith.addf %179, %182 : vector<1x128xf32>
    %184 = vector.extract_strided_slice %4 {offsets = [3, 0], sizes = [1, 128], strides = [1, 1]} : vector<4x128xf32> to vector<1x128xf32>
    %185 = vector.extract_strided_slice %172 {offsets = [3, 0], sizes = [1, 128], strides = [1, 1]} : vector<4x128xf32> to vector<1x128xf32>
    %186 = arith.mulf %184, %185 : vector<1x128xf32>
    %187 = arith.addf %183, %186 : vector<1x128xf32>
    %188 = arith.index_cast %c3_i32 : i32 to index
    %c0_22 = arith.constant 0 : index
    %189 = vector.load %arg6[%188, %c0_22] : memref<8x128xf32, #tpu.memory_space<vmem>>, vector<1x128xf32>
    tpu.vector_store %arg6[%188, %c0_22], %187 {strides = array<i32>} : memref<8x128xf32, #tpu.memory_space<vmem>>, vector<1x128xf32>,
    %c4_i32 = arith.constant 4 : i32
    %190 = arith.index_cast %c4_i32 : i32 to index
    %c0_23 = arith.constant 0 : index
    %c0_24 = arith.constant 0 : index
    %191 = vector.load %arg2[%190, %c0_23, %c0_24] : memref<8x4x128xf32, #tpu.memory_space<vmem>>, vector<1x4x128xf32>
    %192 = vector.shape_cast %191 : vector<1x4x128xf32> to vector<4x128xf32>
    %193 = vector.extract_strided_slice %3 {offsets = [0, 0, 0], sizes = [1, 4, 128], strides = [1, 1, 1]} : vector<4x4x128xf32> to vector<1x4x128xf32>
    %194 = vector.shape_cast %193 : vector<1x4x128xf32> to vector<4x128xf32>
    %195 = vector.extract_strided_slice %172 {offsets = [0, 0], sizes = [1, 128], strides = [1, 1]} : vector<4x128xf32> to vector<1x128xf32>
    %196 = vector.broadcast %195 : vector<1x128xf32> to vector<4x128xf32>
    %197 = arith.mulf %194, %196 : vector<4x128xf32>
    %198 = arith.addf %192, %197 : vector<4x128xf32>
    %199 = vector.extract_strided_slice %3 {offsets = [1, 0, 0], sizes = [1, 4, 128], strides = [1, 1, 1]} : vector<4x4x128xf32> to vector<1x4x128xf32>
    %200 = vector.shape_cast %199 : vector<1x4x128xf32> to vector<4x128xf32>
    %201 = vector.extract_strided_slice %172 {offsets = [1, 0], sizes = [1, 128], strides = [1, 1]} : vector<4x128xf32> to vector<1x128xf32>
    %202 = vector.broadcast %201 : vector<1x128xf32> to vector<4x128xf32>
    %203 = arith.mulf %200, %202 : vector<4x128xf32>
    %204 = arith.addf %198, %203 : vector<4x128xf32>
    %205 = vector.extract_strided_slice %3 {offsets = [2, 0, 0], sizes = [1, 4, 128], strides = [1, 1, 1]} : vector<4x4x128xf32> to vector<1x4x128xf32>
    %206 = vector.shape_cast %205 : vector<1x4x128xf32> to vector<4x128xf32>
    %207 = vector.extract_strided_slice %172 {offsets = [2, 0], sizes = [1, 128], strides = [1, 1]} : vector<4x128xf32> to vector<1x128xf32>
    %208 = vector.broadcast %207 : vector<1x128xf32> to vector<4x128xf32>
    %209 = arith.mulf %206, %208 : vector<4x128xf32>
    %210 = arith.addf %204, %209 : vector<4x128xf32>
    %211 = vector.extract_strided_slice %3 {offsets = [3, 0, 0], sizes = [1, 4, 128], strides = [1, 1, 1]} : vector<4x4x128xf32> to vector<1x4x128xf32>
    %212 = vector.shape_cast %211 : vector<1x4x128xf32> to vector<4x128xf32>
    %213 = vector.extract_strided_slice %172 {offsets = [3, 0], sizes = [1, 128], strides = [1, 1]} : vector<4x128xf32> to vector<1x128xf32>
    %214 = vector.broadcast %213 : vector<1x128xf32> to vector<4x128xf32>
    %215 = arith.mulf %212, %214 : vector<4x128xf32>
    %216 = arith.addf %210, %215 : vector<4x128xf32>
    %cst_25 = arith.constant 0.000000e+00 : f32
    %217 = vector.broadcast %cst_25 : f32 to vector<4x128xf32>
    %218 = arith.maximumf %216, %217 : vector<4x128xf32>
    %219 = vector.extract_strided_slice %4 {offsets = [0, 0], sizes = [1, 128], strides = [1, 1]} : vector<4x128xf32> to vector<1x128xf32>
    %220 = vector.extract_strided_slice %218 {offsets = [0, 0], sizes = [1, 128], strides = [1, 1]} : vector<4x128xf32> to vector<1x128xf32>
    %221 = arith.mulf %219, %220 : vector<1x128xf32>
    %222 = vector.extract_strided_slice %4 {offsets = [1, 0], sizes = [1, 128], strides = [1, 1]} : vector<4x128xf32> to vector<1x128xf32>
    %223 = vector.extract_strided_slice %218 {offsets = [1, 0], sizes = [1, 128], strides = [1, 1]} : vector<4x128xf32> to vector<1x128xf32>
    %224 = arith.mulf %222, %223 : vector<1x128xf32>
    %225 = arith.addf %221, %224 : vector<1x128xf32>
    %226 = vector.extract_strided_slice %4 {offsets = [2, 0], sizes = [1, 128], strides = [1, 1]} : vector<4x128xf32> to vector<1x128xf32>
    %227 = vector.extract_strided_slice %218 {offsets = [2, 0], sizes = [1, 128], strides = [1, 1]} : vector<4x128xf32> to vector<1x128xf32>
    %228 = arith.mulf %226, %227 : vector<1x128xf32>
    %229 = arith.addf %225, %228 : vector<1x128xf32>
    %230 = vector.extract_strided_slice %4 {offsets = [3, 0], sizes = [1, 128], strides = [1, 1]} : vector<4x128xf32> to vector<1x128xf32>
    %231 = vector.extract_strided_slice %218 {offsets = [3, 0], sizes = [1, 128], strides = [1, 1]} : vector<4x128xf32> to vector<1x128xf32>
    %232 = arith.mulf %230, %231 : vector<1x128xf32>
    %233 = arith.addf %229, %232 : vector<1x128xf32>
    %234 = arith.index_cast %c4_i32 : i32 to index
    %c0_26 = arith.constant 0 : index
    %235 = vector.load %arg6[%234, %c0_26] : memref<8x128xf32, #tpu.memory_space<vmem>>, vector<1x128xf32>
    tpu.vector_store %arg6[%234, %c0_26], %233 {strides = array<i32>} : memref<8x128xf32, #tpu.memory_space<vmem>>, vector<1x128xf32>,
    %c5_i32 = arith.constant 5 : i32
    %236 = arith.index_cast %c5_i32 : i32 to index
    %c0_27 = arith.constant 0 : index
    %c0_28 = arith.constant 0 : index
    %237 = vector.load %arg2[%236, %c0_27, %c0_28] : memref<8x4x128xf32, #tpu.memory_space<vmem>>, vector<1x4x128xf32>
    %238 = vector.shape_cast %237 : vector<1x4x128xf32> to vector<4x128xf32>
    %239 = vector.extract_strided_slice %3 {offsets = [0, 0, 0], sizes = [1, 4, 128], strides = [1, 1, 1]} : vector<4x4x128xf32> to vector<1x4x128xf32>
    %240 = vector.shape_cast %239 : vector<1x4x128xf32> to vector<4x128xf32>
    %241 = vector.extract_strided_slice %218 {offsets = [0, 0], sizes = [1, 128], strides = [1, 1]} : vector<4x128xf32> to vector<1x128xf32>
    %242 = vector.broadcast %241 : vector<1x128xf32> to vector<4x128xf32>
    %243 = arith.mulf %240, %242 : vector<4x128xf32>
    %244 = arith.addf %238, %243 : vector<4x128xf32>
    %245 = vector.extract_strided_slice %3 {offsets = [1, 0, 0], sizes = [1, 4, 128], strides = [1, 1, 1]} : vector<4x4x128xf32> to vector<1x4x128xf32>
    %246 = vector.shape_cast %245 : vector<1x4x128xf32> to vector<4x128xf32>
    %247 = vector.extract_strided_slice %218 {offsets = [1, 0], sizes = [1, 128], strides = [1, 1]} : vector<4x128xf32> to vector<1x128xf32>
    %248 = vector.broadcast %247 : vector<1x128xf32> to vector<4x128xf32>
    %249 = arith.mulf %246, %248 : vector<4x128xf32>
    %250 = arith.addf %244, %249 : vector<4x128xf32>
    %251 = vector.extract_strided_slice %3 {offsets = [2, 0, 0], sizes = [1, 4, 128], strides = [1, 1, 1]} : vector<4x4x128xf32> to vector<1x4x128xf32>
    %252 = vector.shape_cast %251 : vector<1x4x128xf32> to vector<4x128xf32>
    %253 = vector.extract_strided_slice %218 {offsets = [2, 0], sizes = [1, 128], strides = [1, 1]} : vector<4x128xf32> to vector<1x128xf32>
    %254 = vector.broadcast %253 : vector<1x128xf32> to vector<4x128xf32>
    %255 = arith.mulf %252, %254 : vector<4x128xf32>
    %256 = arith.addf %250, %255 : vector<4x128xf32>
    %257 = vector.extract_strided_slice %3 {offsets = [3, 0, 0], sizes = [1, 4, 128], strides = [1, 1, 1]} : vector<4x4x128xf32> to vector<1x4x128xf32>
    %258 = vector.shape_cast %257 : vector<1x4x128xf32> to vector<4x128xf32>
    %259 = vector.extract_strided_slice %218 {offsets = [3, 0], sizes = [1, 128], strides = [1, 1]} : vector<4x128xf32> to vector<1x128xf32>
    %260 = vector.broadcast %259 : vector<1x128xf32> to vector<4x128xf32>
    %261 = arith.mulf %258, %260 : vector<4x128xf32>
    %262 = arith.addf %256, %261 : vector<4x128xf32>
    %cst_29 = arith.constant 0.000000e+00 : f32
    %263 = vector.broadcast %cst_29 : f32 to vector<4x128xf32>
    %264 = arith.maximumf %262, %263 : vector<4x128xf32>
    %265 = vector.extract_strided_slice %4 {offsets = [0, 0], sizes = [1, 128], strides = [1, 1]} : vector<4x128xf32> to vector<1x128xf32>
    %266 = vector.extract_strided_slice %264 {offsets = [0, 0], sizes = [1, 128], strides = [1, 1]} : vector<4x128xf32> to vector<1x128xf32>
    %267 = arith.mulf %265, %266 : vector<1x128xf32>
    %268 = vector.extract_strided_slice %4 {offsets = [1, 0], sizes = [1, 128], strides = [1, 1]} : vector<4x128xf32> to vector<1x128xf32>
    %269 = vector.extract_strided_slice %264 {offsets = [1, 0], sizes = [1, 128], strides = [1, 1]} : vector<4x128xf32> to vector<1x128xf32>
    %270 = arith.mulf %268, %269 : vector<1x128xf32>
    %271 = arith.addf %267, %270 : vector<1x128xf32>
    %272 = vector.extract_strided_slice %4 {offsets = [2, 0], sizes = [1, 128], strides = [1, 1]} : vector<4x128xf32> to vector<1x128xf32>
    %273 = vector.extract_strided_slice %264 {offsets = [2, 0], sizes = [1, 128], strides = [1, 1]} : vector<4x128xf32> to vector<1x128xf32>
    %274 = arith.mulf %272, %273 : vector<1x128xf32>
    %275 = arith.addf %271, %274 : vector<1x128xf32>
    %276 = vector.extract_strided_slice %4 {offsets = [3, 0], sizes = [1, 128], strides = [1, 1]} : vector<4x128xf32> to vector<1x128xf32>
    %277 = vector.extract_strided_slice %264 {offsets = [3, 0], sizes = [1, 128], strides = [1, 1]} : vector<4x128xf32> to vector<1x128xf32>
    %278 = arith.mulf %276, %277 : vector<1x128xf32>
    %279 = arith.addf %275, %278 : vector<1x128xf32>
    %280 = arith.index_cast %c5_i32 : i32 to index
    %c0_30 = arith.constant 0 : index
    %281 = vector.load %arg6[%280, %c0_30] : memref<8x128xf32, #tpu.memory_space<vmem>>, vector<1x128xf32>
    tpu.vector_store %arg6[%280, %c0_30], %279 {strides = array<i32>} : memref<8x128xf32, #tpu.memory_space<vmem>>, vector<1x128xf32>,
    %c6_i32 = arith.constant 6 : i32
    %282 = arith.index_cast %c6_i32 : i32 to index
    %c0_31 = arith.constant 0 : index
    %c0_32 = arith.constant 0 : index
    %283 = vector.load %arg2[%282, %c0_31, %c0_32] : memref<8x4x128xf32, #tpu.memory_space<vmem>>, vector<1x4x128xf32>
    %284 = vector.shape_cast %283 : vector<1x4x128xf32> to vector<4x128xf32>
    %285 = vector.extract_strided_slice %3 {offsets = [0, 0, 0], sizes = [1, 4, 128], strides = [1, 1, 1]} : vector<4x4x128xf32> to vector<1x4x128xf32>
    %286 = vector.shape_cast %285 : vector<1x4x128xf32> to vector<4x128xf32>
    %287 = vector.extract_strided_slice %264 {offsets = [0, 0], sizes = [1, 128], strides = [1, 1]} : vector<4x128xf32> to vector<1x128xf32>
    %288 = vector.broadcast %287 : vector<1x128xf32> to vector<4x128xf32>
    %289 = arith.mulf %286, %288 : vector<4x128xf32>
    %290 = arith.addf %284, %289 : vector<4x128xf32>
    %291 = vector.extract_strided_slice %3 {offsets = [1, 0, 0], sizes = [1, 4, 128], strides = [1, 1, 1]} : vector<4x4x128xf32> to vector<1x4x128xf32>
    %292 = vector.shape_cast %291 : vector<1x4x128xf32> to vector<4x128xf32>
    %293 = vector.extract_strided_slice %264 {offsets = [1, 0], sizes = [1, 128], strides = [1, 1]} : vector<4x128xf32> to vector<1x128xf32>
    %294 = vector.broadcast %293 : vector<1x128xf32> to vector<4x128xf32>
    %295 = arith.mulf %292, %294 : vector<4x128xf32>
    %296 = arith.addf %290, %295 : vector<4x128xf32>
    %297 = vector.extract_strided_slice %3 {offsets = [2, 0, 0], sizes = [1, 4, 128], strides = [1, 1, 1]} : vector<4x4x128xf32> to vector<1x4x128xf32>
    %298 = vector.shape_cast %297 : vector<1x4x128xf32> to vector<4x128xf32>
    %299 = vector.extract_strided_slice %264 {offsets = [2, 0], sizes = [1, 128], strides = [1, 1]} : vector<4x128xf32> to vector<1x128xf32>
    %300 = vector.broadcast %299 : vector<1x128xf32> to vector<4x128xf32>
    %301 = arith.mulf %298, %300 : vector<4x128xf32>
    %302 = arith.addf %296, %301 : vector<4x128xf32>
    %303 = vector.extract_strided_slice %3 {offsets = [3, 0, 0], sizes = [1, 4, 128], strides = [1, 1, 1]} : vector<4x4x128xf32> to vector<1x4x128xf32>
    %304 = vector.shape_cast %303 : vector<1x4x128xf32> to vector<4x128xf32>
    %305 = vector.extract_strided_slice %264 {offsets = [3, 0], sizes = [1, 128], strides = [1, 1]} : vector<4x128xf32> to vector<1x128xf32>
    %306 = vector.broadcast %305 : vector<1x128xf32> to vector<4x128xf32>
    %307 = arith.mulf %304, %306 : vector<4x128xf32>
    %308 = arith.addf %302, %307 : vector<4x128xf32>
    %cst_33 = arith.constant 0.000000e+00 : f32
    %309 = vector.broadcast %cst_33 : f32 to vector<4x128xf32>
    %310 = arith.maximumf %308, %309 : vector<4x128xf32>
    %311 = vector.extract_strided_slice %4 {offsets = [0, 0], sizes = [1, 128], strides = [1, 1]} : vector<4x128xf32> to vector<1x128xf32>
    %312 = vector.extract_strided_slice %310 {offsets = [0, 0], sizes = [1, 128], strides = [1, 1]} : vector<4x128xf32> to vector<1x128xf32>
    %313 = arith.mulf %311, %312 : vector<1x128xf32>
    %314 = vector.extract_strided_slice %4 {offsets = [1, 0], sizes = [1, 128], strides = [1, 1]} : vector<4x128xf32> to vector<1x128xf32>
    %315 = vector.extract_strided_slice %310 {offsets = [1, 0], sizes = [1, 128], strides = [1, 1]} : vector<4x128xf32> to vector<1x128xf32>
    %316 = arith.mulf %314, %315 : vector<1x128xf32>
    %317 = arith.addf %313, %316 : vector<1x128xf32>
    %318 = vector.extract_strided_slice %4 {offsets = [2, 0], sizes = [1, 128], strides = [1, 1]} : vector<4x128xf32> to vector<1x128xf32>
    %319 = vector.extract_strided_slice %310 {offsets = [2, 0], sizes = [1, 128], strides = [1, 1]} : vector<4x128xf32> to vector<1x128xf32>
    %320 = arith.mulf %318, %319 : vector<1x128xf32>
    %321 = arith.addf %317, %320 : vector<1x128xf32>
    %322 = vector.extract_strided_slice %4 {offsets = [3, 0], sizes = [1, 128], strides = [1, 1]} : vector<4x128xf32> to vector<1x128xf32>
    %323 = vector.extract_strided_slice %310 {offsets = [3, 0], sizes = [1, 128], strides = [1, 1]} : vector<4x128xf32> to vector<1x128xf32>
    %324 = arith.mulf %322, %323 : vector<1x128xf32>
    %325 = arith.addf %321, %324 : vector<1x128xf32>
    %326 = arith.index_cast %c6_i32 : i32 to index
    %c0_34 = arith.constant 0 : index
    %327 = vector.load %arg6[%326, %c0_34] : memref<8x128xf32, #tpu.memory_space<vmem>>, vector<1x128xf32>
    tpu.vector_store %arg6[%326, %c0_34], %325 {strides = array<i32>} : memref<8x128xf32, #tpu.memory_space<vmem>>, vector<1x128xf32>,
    %c7_i32 = arith.constant 7 : i32
    %328 = arith.index_cast %c7_i32 : i32 to index
    %c0_35 = arith.constant 0 : index
    %c0_36 = arith.constant 0 : index
    %329 = vector.load %arg2[%328, %c0_35, %c0_36] : memref<8x4x128xf32, #tpu.memory_space<vmem>>, vector<1x4x128xf32>
    %330 = vector.shape_cast %329 : vector<1x4x128xf32> to vector<4x128xf32>
    %331 = vector.extract_strided_slice %3 {offsets = [0, 0, 0], sizes = [1, 4, 128], strides = [1, 1, 1]} : vector<4x4x128xf32> to vector<1x4x128xf32>
    %332 = vector.shape_cast %331 : vector<1x4x128xf32> to vector<4x128xf32>
    %333 = vector.extract_strided_slice %310 {offsets = [0, 0], sizes = [1, 128], strides = [1, 1]} : vector<4x128xf32> to vector<1x128xf32>
    %334 = vector.broadcast %333 : vector<1x128xf32> to vector<4x128xf32>
    %335 = arith.mulf %332, %334 : vector<4x128xf32>
    %336 = arith.addf %330, %335 : vector<4x128xf32>
    %337 = vector.extract_strided_slice %3 {offsets = [1, 0, 0], sizes = [1, 4, 128], strides = [1, 1, 1]} : vector<4x4x128xf32> to vector<1x4x128xf32>
    %338 = vector.shape_cast %337 : vector<1x4x128xf32> to vector<4x128xf32>
    %339 = vector.extract_strided_slice %310 {offsets = [1, 0], sizes = [1, 128], strides = [1, 1]} : vector<4x128xf32> to vector<1x128xf32>
    %340 = vector.broadcast %339 : vector<1x128xf32> to vector<4x128xf32>
    %341 = arith.mulf %338, %340 : vector<4x128xf32>
    %342 = arith.addf %336, %341 : vector<4x128xf32>
    %343 = vector.extract_strided_slice %3 {offsets = [2, 0, 0], sizes = [1, 4, 128], strides = [1, 1, 1]} : vector<4x4x128xf32> to vector<1x4x128xf32>
    %344 = vector.shape_cast %343 : vector<1x4x128xf32> to vector<4x128xf32>
    %345 = vector.extract_strided_slice %310 {offsets = [2, 0], sizes = [1, 128], strides = [1, 1]} : vector<4x128xf32> to vector<1x128xf32>
    %346 = vector.broadcast %345 : vector<1x128xf32> to vector<4x128xf32>
    %347 = arith.mulf %344, %346 : vector<4x128xf32>
    %348 = arith.addf %342, %347 : vector<4x128xf32>
    %349 = vector.extract_strided_slice %3 {offsets = [3, 0, 0], sizes = [1, 4, 128], strides = [1, 1, 1]} : vector<4x4x128xf32> to vector<1x4x128xf32>
    %350 = vector.shape_cast %349 : vector<1x4x128xf32> to vector<4x128xf32>
    %351 = vector.extract_strided_slice %310 {offsets = [3, 0], sizes = [1, 128], strides = [1, 1]} : vector<4x128xf32> to vector<1x128xf32>
    %352 = vector.broadcast %351 : vector<1x128xf32> to vector<4x128xf32>
    %353 = arith.mulf %350, %352 : vector<4x128xf32>
    %354 = arith.addf %348, %353 : vector<4x128xf32>
    %cst_37 = arith.constant 0.000000e+00 : f32
    %355 = vector.broadcast %cst_37 : f32 to vector<4x128xf32>
    %356 = arith.maximumf %354, %355 : vector<4x128xf32>
    %357 = vector.extract_strided_slice %4 {offsets = [0, 0], sizes = [1, 128], strides = [1, 1]} : vector<4x128xf32> to vector<1x128xf32>
    %358 = vector.extract_strided_slice %356 {offsets = [0, 0], sizes = [1, 128], strides = [1, 1]} : vector<4x128xf32> to vector<1x128xf32>
    %359 = arith.mulf %357, %358 : vector<1x128xf32>
    %360 = vector.extract_strided_slice %4 {offsets = [1, 0], sizes = [1, 128], strides = [1, 1]} : vector<4x128xf32> to vector<1x128xf32>
    %361 = vector.extract_strided_slice %356 {offsets = [1, 0], sizes = [1, 128], strides = [1, 1]} : vector<4x128xf32> to vector<1x128xf32>
    %362 = arith.mulf %360, %361 : vector<1x128xf32>
    %363 = arith.addf %359, %362 : vector<1x128xf32>
    %364 = vector.extract_strided_slice %4 {offsets = [2, 0], sizes = [1, 128], strides = [1, 1]} : vector<4x128xf32> to vector<1x128xf32>
    %365 = vector.extract_strided_slice %356 {offsets = [2, 0], sizes = [1, 128], strides = [1, 1]} : vector<4x128xf32> to vector<1x128xf32>
    %366 = arith.mulf %364, %365 : vector<1x128xf32>
    %367 = arith.addf %363, %366 : vector<1x128xf32>
    %368 = vector.extract_strided_slice %4 {offsets = [3, 0], sizes = [1, 128], strides = [1, 1]} : vector<4x128xf32> to vector<1x128xf32>
    %369 = vector.extract_strided_slice %356 {offsets = [3, 0], sizes = [1, 128], strides = [1, 1]} : vector<4x128xf32> to vector<1x128xf32>
    %370 = arith.mulf %368, %369 : vector<1x128xf32>
    %371 = arith.addf %367, %370 : vector<1x128xf32>
    %372 = arith.index_cast %c7_i32 : i32 to index
    %c0_38 = arith.constant 0 : index
    %373 = vector.load %arg6[%372, %c0_38] : memref<8x128xf32, #tpu.memory_space<vmem>>, vector<1x128xf32>
    tpu.vector_store %arg6[%372, %c0_38], %371 {strides = array<i32>} : memref<8x128xf32, #tpu.memory_space<vmem>>, vector<1x128xf32>,
    %c8_i32 = arith.constant 8 : i32
    %c0_39 = arith.constant 0 : index
    %c0_40 = arith.constant 0 : index
    %374 = vector.load %arg8[%c0_39, %c0_40] : memref<4x128xf32, #tpu.memory_space<vmem>>, vector<4x128xf32>
    tpu.vector_store %arg8[%c0_39, %c0_40], %356 {strides = array<i32>} : memref<4x128xf32, #tpu.memory_space<vmem>>, vector<4x128xf32>,
    %c0_i32_41 = arith.constant 0 : i32
    %375 = arith.cmpi eq, %arg1, %c0_i32_41 : i32
    %376 = arith.extui %375 : i1 to i32
    %c0_i32_42 = arith.constant 0 : i32
    %377 = arith.cmpi ne, %376, %c0_i32_42 : i32
    scf.if %377 {
      %c0_43 = arith.constant 0 : index
      %c0_44 = arith.constant 0 : index
      %378 = vector.load %arg7[%c0_43, %c0_44] : memref<4x128xf32, #tpu.memory_space<vmem>>, vector<4x128xf32>
      tpu.vector_store %arg7[%c0_43, %c0_44], %356 {strides = array<i32>} : memref<4x128xf32, #tpu.memory_space<vmem>>, vector<4x128xf32>,
    } else {
    }
    return
  }
  func.func @transform_0(%arg0: i32, %arg1: i32) -> (i32, i32, i32) {
    %c0_i32 = arith.constant 0 : i32
    %c0_i32_0 = arith.constant 0 : i32
    return %arg1, %c0_i32, %arg0 : i32, i32, i32
  }
  func.func @transform_1(%arg0: i32, %arg1: i32) -> (i32, i32) {
    %c0_i32 = arith.constant 0 : i32
    %c0_i32_0 = arith.constant 0 : i32
    return %c0_i32, %arg0 : i32, i32
  }
  func.func @transform_2(%arg0: i32, %arg1: i32) -> (i32, i32, i32) {
    %c0_i32 = arith.constant 0 : i32
    %c0_i32_0 = arith.constant 0 : i32
    %c0_i32_1 = arith.constant 0 : i32
    %c0_i32_2 = arith.constant 0 : i32
    return %c0_i32, %c0_i32_0, %c0_i32_1 : i32, i32, i32
  }
  func.func @transform_3(%arg0: i32, %arg1: i32) -> (i32, i32) {
    %c0_i32 = arith.constant 0 : i32
    %c0_i32_0 = arith.constant 0 : i32
    %c0_i32_1 = arith.constant 0 : i32
    return %c0_i32, %c0_i32_0 : i32, i32
  }
  func.func @transform_4(%arg0: i32, %arg1: i32) -> (i32, i32) {
    %c0_i32 = arith.constant 0 : i32
    return %arg1, %arg0 : i32, i32
  }
  func.func @transform_5(%arg0: i32, %arg1: i32) -> (i32, i32) {
    %c0_i32 = arith.constant 0 : i32
    %c0_i32_0 = arith.constant 0 : i32
    return %c0_i32, %arg0 : i32, i32
  }
}

</mosaic_0001>

<llo_original>
// kernel: rnn_forward.1
$region0: #{rnn_forward.1}
  #allocation0 [shape = 'u32[]', space=smem, size = 0x4, offset = 0x4, fixed_abs, tag = 'smem constant byte address 0x4 - core index']
  #allocation1 [shape = 'u32[144,128]{1,0:T(1,128)}', space=vmem, size = 0x12000, scoped, tag = 'internal scratch']
  #allocation2 [shape = 'f32[4,128]{1,0:T(4,128)}', space=vmem, size = 0x800, scoped, tag = 'scratch operand']
  %s0 = inlined_call_operand.vmem [shape: f32[8,4,128], index: 0, kind: input, shape index: {}]
  %s1 = inlined_call_operand.vmem [shape: f32[4,128], index: 1, kind: input, shape index: {}]
  %s2 = inlined_call_operand.vmem [shape: f32[4,4,128], index: 2, kind: input, shape index: {}]
  %s3 = inlined_call_operand.vmem [shape: f32[4,128], index: 3, kind: input, shape index: {}]
  %s4 = inlined_call_operand.vmem [shape: f32[8,128], index: 4, kind: output, shape index: {0}]
  %s5 = inlined_call_operand.vmem [shape: f32[4,128], index: 5, kind: output, shape index: {1}]
  %6 = xla_tuple %s4, %s5
  %s7 = sld [smem:[#allocation0]]
  $region42: #{rnn_forward.1} parent=0
    _
  %s9 = ssub.s32 1, %s7
  %s10 = scalar_select 0, %s9, %s7
  // Predicated region
  $region2: #{rnn_forward.1} parent=0 // pred_check
    _
  $region3: #{rnn_forward.1} parent=0 // pred_check_branch
    %12 = sbr.rel (0) target = $region5
  $region4: #{rnn_forward.1} parent=0 // pred_region
    _
  $region5: #{rnn_forward.1} parent=0 // pred_fallthru
    _
  // Predicated region
  $region6: #{rnn_forward.1} parent=0 // pred_check
    _
  $region7: #{rnn_forward.1} parent=0 // pred_check_branch
    %14 = sbr.rel (0) target = $region9
  $region8: #{rnn_forward.1} parent=0 // pred_region
    _
  $region9: #{rnn_forward.1} parent=0 // pred_fallthru
    _
  // Predicated region
  $region10: #{rnn_forward.1} parent=0 // pred_check
    _
  $region11: #{rnn_forward.1} parent=0 // pred_check_branch
    %16 = sbr.rel (0) target = $region13
  $region12: #{rnn_forward.1} parent=0 // pred_region
    _
  $region13: #{rnn_forward.1} parent=0 // pred_fallthru
    _
  // Predicated region
  $region14: #{rnn_forward.1} parent=0 // pred_check
    _
  $region15: #{rnn_forward.1} parent=0 // pred_check_branch
    %18 = sbr.rel (0) target = $region17
  $region16: #{rnn_forward.1} parent=0 // pred_region
    _
  $region17: #{rnn_forward.1} parent=0 // pred_fallthru
    _
  %p19 = scmp.eq.s32.totalorder 0, 0
  // Predicated region
  $region18: #{rnn_forward.1} parent=0 // pred_check
    %p20 = pneg %p19
  $region19: #{rnn_forward.1} parent=0 // pred_check_branch
    %22 = sbr.rel (%p20) target = $region21
  $region20: #{rnn_forward.1} parent=0 // pred_region
    %v23 = vld [vmem:[%s1] sm:$0xf]
    %24 = vst [vmem:[#allocation2] sm:$0xf] %v23
  $region21: #{rnn_forward.1} parent=0 // pred_fallthru
    _
  %v25 = vld [vmem:[%s2] sm:$0xf]
  %v26 = vld [vmem:[%s2 + $0x4] sm:$0xf]
  %v27 = vld [vmem:[%s2 + $0x8] sm:$0xf]
  %v28 = vld [vmem:[%s2 + $0xc] sm:$0xf]
  %v29 = vld [vmem:[%s3] sm:$0xf]
  %v30 = vld [vmem:[#allocation2] sm:$0xf]
  %v31 = vld [vmem:[%s0] sm:$0xf]
  %v32 = vlaneseq
  %v33 = vshrl.u32 %v32, 7
  %v34 = vsub.s32 0, %v33
  %v35 = vrot.slane %v30, %v34
  %v36 = vmul.f32 %v25, %v35
  %v37 = vadd.f32 %v31, %v36
  %v38 = vlaneseq
  %v39 = vshrl.u32 %v38, 7
  %v40 = vsub.s32 1, %v39
  %v41 = vrot.slane %v30, %v40
  %v42 = vmul.f32 %v26, %v41
  %v43 = vadd.f32 %v37, %v42
  %v44 = vlaneseq
  %v45 = vshrl.u32 %v44, 7
  %v46 = vsub.s32 2, %v45
  %v47 = vrot.slane %v30, %v46
  %v48 = vmul.f32 %v27, %v47
  %v49 = vadd.f32 %v43, %v48
  %v50 = vlaneseq
  %v51 = vshrl.u32 %v50, 7
  %v52 = vsub.s32 3, %v51
  %v53 = vrot.slane %v30, %v52
  %v54 = vmul.f32 %v28, %v53
  %v55 = vadd.f32 %v49, %v54
  %v56 = vmax.f32 %v55, 0.0
  %v57 = vmul.f32 %v29, %v56
  %v59 = vrot.slane %v57, 1
  %v61 = vadd.f32 %v57, %v59
  %v62 = vrot.slane %v57, 2
  %v64 = vadd.f32 %v61, %v62
  %v65 = vrot.slane %v57, 3
  %v67 = vadd.f32 %v64, %v65
  %68 = vst [vmem:[%s4] sm:$0x1] %v67
  %s69 = scalar_lea.vmem %s0, 4
  %v70 = vld [vmem:[%s69] sm:$0xf]
  %v71 = vlaneseq
  %v72 = vshrl.u32 %v71, 7
  %v73 = vsub.s32 0, %v72
  %v74 = vrot.slane %v56, %v73
  %v75 = vmul.f32 %v25, %v74
  %v76 = vadd.f32 %v70, %v75
  %v77 = vlaneseq
  %v78 = vshrl.u32 %v77, 7
  %v79 = vsub.s32 1, %v78
  %v80 = vrot.slane %v56, %v79
  %v81 = vmul.f32 %v26, %v80
  %v82 = vadd.f32 %v76, %v81
  %v83 = vlaneseq
  %v84 = vshrl.u32 %v83, 7
  %v85 = vsub.s32 2, %v84
  %v86 = vrot.slane %v56, %v85
  %v87 = vmul.f32 %v27, %v86
  %v88 = vadd.f32 %v82, %v87
  %v89 = vlaneseq
  %v90 = vshrl.u32 %v89, 7
  %v91 = vsub.s32 3, %v90
  %v92 = vrot.slane %v56, %v91
  %v93 = vmul.f32 %v28, %v92
  %v94 = vadd.f32 %v88, %v93
  %v95 = vmax.f32 %v94, 0.0
  %v96 = vmul.f32 %v29, %v95
  %v98 = vrot.slane %v96, 1
  %v100 = vadd.f32 %v96, %v98
  %v101 = vrot.slane %v96, 2
  %v103 = vadd.f32 %v100, %v101
  %v104 = vrot.slane %v96, 3
  %v106 = vadd.f32 %v103, %v104
  %107 = vst [vmem:[%s4 + $0x1] sm:$0x1] %v106
  %s108 = scalar_lea.vmem %s0, 8
  %v109 = vld [vmem:[%s108] sm:$0xf]
  %v110 = vlaneseq
  %v111 = vshrl.u32 %v110, 7
  %v112 = vsub.s32 0, %v111
  %v113 = vrot.slane %v95, %v112
  %v114 = vmul.f32 %v25, %v113
  %v115 = vadd.f32 %v109, %v114
  %v116 = vlaneseq
  %v117 = vshrl.u32 %v116, 7
  %v118 = vsub.s32 1, %v117
  %v119 = vrot.slane %v95, %v118
  %v120 = vmul.f32 %v26, %v119
  %v121 = vadd.f32 %v115, %v120
  %v122 = vlaneseq
  %v123 = vshrl.u32 %v122, 7
  %v124 = vsub.s32 2, %v123
  %v125 = vrot.slane %v95, %v124
  %v126 = vmul.f32 %v27, %v125
  %v127 = vadd.f32 %v121, %v126
  %v128 = vlaneseq
  %v129 = vshrl.u32 %v128, 7
  %v130 = vsub.s32 3, %v129
  %v131 = vrot.slane %v95, %v130
  %v132 = vmul.f32 %v28, %v131
  %v133 = vadd.f32 %v127, %v132
  %v134 = vmax.f32 %v133, 0.0
  %v135 = vmul.f32 %v29, %v134
  %v137 = vrot.slane %v135, 1
  %v139 = vadd.f32 %v135, %v137
  %v140 = vrot.slane %v135, 2
  %v142 = vadd.f32 %v139, %v140
  %v143 = vrot.slane %v135, 3
  %v145 = vadd.f32 %v142, %v143
  %146 = vst [vmem:[%s4 + $0x2] sm:$0x1] %v145
  %s147 = scalar_lea.vmem %s0, 12
  %v148 = vld [vmem:[%s147] sm:$0xf]
  %v149 = vlaneseq
  %v150 = vshrl.u32 %v149, 7
  %v151 = vsub.s32 0, %v150
  %v152 = vrot.slane %v134, %v151
  %v153 = vmul.f32 %v25, %v152
  %v154 = vadd.f32 %v148, %v153
  %v155 = vlaneseq
  %v156 = vshrl.u32 %v155, 7
  %v157 = vsub.s32 1, %v156
  %v158 = vrot.slane %v134, %v157
  %v159 = vmul.f32 %v26, %v158
  %v160 = vadd.f32 %v154, %v159
  %v161 = vlaneseq
  %v162 = vshrl.u32 %v161, 7
  %v163 = vsub.s32 2, %v162
  %v164 = vrot.slane %v134, %v163
  %v165 = vmul.f32 %v27, %v164
  %v166 = vadd.f32 %v160, %v165
  %v167 = vlaneseq
  %v168 = vshrl.u32 %v167, 7
  %v169 = vsub.s32 3, %v168
  %v170 = vrot.slane %v134, %v169
  %v171 = vmul.f32 %v28, %v170
  %v172 = vadd.f32 %v166, %v171
  %v173 = vmax.f32 %v172, 0.0
  %v174 = vmul.f32 %v29, %v173
  %v176 = vrot.slane %v174, 1
  %v178 = vadd.f32 %v174, %v176
  %v179 = vrot.slane %v174, 2
  %v181 = vadd.f32 %v178, %v179
  %v182 = vrot.slane %v174, 3
  %v184 = vadd.f32 %v181, %v182
  %185 = vst [vmem:[%s4 + $0x3] sm:$0x1] %v184
  %s186 = scalar_lea.vmem %s0, 16
  %v187 = vld [vmem:[%s186] sm:$0xf]
  %v188 = vlaneseq
  %v189 = vshrl.u32 %v188, 7
  %v190 = vsub.s32 0, %v189
  %v191 = vrot.slane %v173, %v190
  %v192 = vmul.f32 %v25, %v191
  %v193 = vadd.f32 %v187, %v192
  %v194 = vlaneseq
  %v195 = vshrl.u32 %v194, 7
  %v196 = vsub.s32 1, %v195
  %v197 = vrot.slane %v173, %v196
  %v198 = vmul.f32 %v26, %v197
  %v199 = vadd.f32 %v193, %v198
  %v200 = vlaneseq
  %v201 = vshrl.u32 %v200, 7
  %v202 = vsub.s32 2, %v201
  %v203 = vrot.slane %v173, %v202
  %v204 = vmul.f32 %v27, %v203
  %v205 = vadd.f32 %v199, %v204
  %v206 = vlaneseq
  %v207 = vshrl.u32 %v206, 7
  %v208 = vsub.s32 3, %v207
  %v209 = vrot.slane %v173, %v208
  %v210 = vmul.f32 %v28, %v209
  %v211 = vadd.f32 %v205, %v210
  %v212 = vmax.f32 %v211, 0.0
  %v213 = vmul.f32 %v29, %v212
  %v215 = vrot.slane %v213, 1
  %v217 = vadd.f32 %v213, %v215
  %v218 = vrot.slane %v213, 2
  %v220 = vadd.f32 %v217, %v218
  %v221 = vrot.slane %v213, 3
  %v223 = vadd.f32 %v220, %v221
  %224 = vst [vmem:[%s4 + $0x4] sm:$0x1] %v223
  %s225 = scalar_lea.vmem %s0, 20
  %v226 = vld [vmem:[%s225] sm:$0xf]
  %v227 = vlaneseq
  %v228 = vshrl.u32 %v227, 7
  %v229 = vsub.s32 0, %v228
  %v230 = vrot.slane %v212, %v229
  %v231 = vmul.f32 %v25, %v230
  %v232 = vadd.f32 %v226, %v231
  %v233 = vlaneseq
  %v234 = vshrl.u32 %v233, 7
  %v235 = vsub.s32 1, %v234
  %v236 = vrot.slane %v212, %v235
  %v237 = vmul.f32 %v26, %v236
  %v238 = vadd.f32 %v232, %v237
  %v239 = vlaneseq
  %v240 = vshrl.u32 %v239, 7
  %v241 = vsub.s32 2, %v240
  %v242 = vrot.slane %v212, %v241
  %v243 = vmul.f32 %v27, %v242
  %v244 = vadd.f32 %v238, %v243
  %v245 = vlaneseq
  %v246 = vshrl.u32 %v245, 7
  %v247 = vsub.s32 3, %v246
  %v248 = vrot.slane %v212, %v247
  %v249 = vmul.f32 %v28, %v248
  %v250 = vadd.f32 %v244, %v249
  %v251 = vmax.f32 %v250, 0.0
  %v252 = vmul.f32 %v29, %v251
  %v254 = vrot.slane %v252, 1
  %v256 = vadd.f32 %v252, %v254
  %v257 = vrot.slane %v252, 2
  %v259 = vadd.f32 %v256, %v257
  %v260 = vrot.slane %v252, 3
  %v262 = vadd.f32 %v259, %v260
  %263 = vst [vmem:[%s4 + $0x5] sm:$0x1] %v262
  %s264 = scalar_lea.vmem %s0, 24
  %v265 = vld [vmem:[%s264] sm:$0xf]
  %v266 = vlaneseq
  %v267 = vshrl.u32 %v266, 7
  %v268 = vsub.s32 0, %v267
  %v269 = vrot.slane %v251, %v268
  %v270 = vmul.f32 %v25, %v269
  %v271 = vadd.f32 %v265, %v270
  %v272 = vlaneseq
  %v273 = vshrl.u32 %v272, 7
  %v274 = vsub.s32 1, %v273
  %v275 = vrot.slane %v251, %v274
  %v276 = vmul.f32 %v26, %v275
  %v277 = vadd.f32 %v271, %v276
  %v278 = vlaneseq
  %v279 = vshrl.u32 %v278, 7
  %v280 = vsub.s32 2, %v279
  %v281 = vrot.slane %v251, %v280
  %v282 = vmul.f32 %v27, %v281
  %v283 = vadd.f32 %v277, %v282
  %v284 = vlaneseq
  %v285 = vshrl.u32 %v284, 7
  %v286 = vsub.s32 3, %v285
  %v287 = vrot.slane %v251, %v286
  %v288 = vmul.f32 %v28, %v287
  %v289 = vadd.f32 %v283, %v288
  %v290 = vmax.f32 %v289, 0.0
  %v291 = vmul.f32 %v29, %v290
  %v293 = vrot.slane %v291, 1
  %v295 = vadd.f32 %v291, %v293
  %v296 = vrot.slane %v291, 2
  %v298 = vadd.f32 %v295, %v296
  %v299 = vrot.slane %v291, 3
  %v301 = vadd.f32 %v298, %v299
  %302 = vst [vmem:[%s4 + $0x6] sm:$0x1] %v301
  %s303 = scalar_lea.vmem %s0, 28
  %v304 = vld [vmem:[%s303] sm:$0xf]
  %v305 = vlaneseq
  %v306 = vshrl.u32 %v305, 7
  %v307 = vsub.s32 0, %v306
  %v308 = vrot.slane %v290, %v307
  %v309 = vmul.f32 %v25, %v308
  %v310 = vadd.f32 %v304, %v309
  %v311 = vlaneseq
  %v312 = vshrl.u32 %v311, 7
  %v313 = vsub.s32 1, %v312
  %v314 = vrot.slane %v290, %v313
  %v315 = vmul.f32 %v26, %v314
  %v316 = vadd.f32 %v310, %v315
  %v317 = vlaneseq
  %v318 = vshrl.u32 %v317, 7
  %v319 = vsub.s32 2, %v318
  %v320 = vrot.slane %v290, %v319
  %v321 = vmul.f32 %v27, %v320
  %v322 = vadd.f32 %v316, %v321
  %v323 = vlaneseq
  %v324 = vshrl.u32 %v323, 7
  %v325 = vsub.s32 3, %v324
  %v326 = vrot.slane %v290, %v325
  %v327 = vmul.f32 %v28, %v326
  %v328 = vadd.f32 %v322, %v327
  %v329 = vmax.f32 %v328, 0.0
  %v330 = vmul.f32 %v29, %v329
  %v332 = vrot.slane %v330, 1
  %v334 = vadd.f32 %v330, %v332
  %v335 = vrot.slane %v330, 2
  %v337 = vadd.f32 %v334, %v335
  %v338 = vrot.slane %v330, 3
  %v340 = vadd.f32 %v337, %v338
  %341 = vst [vmem:[%s4 + $0x7] sm:$0x1] %v340
  %342 = vst [vmem:[#allocation2] sm:$0xf] %v329
  // Predicated region
  $region22: #{rnn_forward.1} parent=0 // pred_check
    %p343 = pneg %p19
  $region23: #{rnn_forward.1} parent=0 // pred_check_branch
    %345 = sbr.rel (%p343) target = $region25
  $region24: #{rnn_forward.1} parent=0 // pred_region
    %346 = vst [vmem:[%s5] sm:$0xf] %v329
  $region25: #{rnn_forward.1} parent=0 // pred_fallthru
    _
  // Predicated region
  $region26: #{rnn_forward.1} parent=0 // pred_check
    _
  $region27: #{rnn_forward.1} parent=0 // pred_check_branch
    %348 = sbr.rel (0) target = $region29
  $region28: #{rnn_forward.1} parent=0 // pred_region
    _
  $region29: #{rnn_forward.1} parent=0 // pred_fallthru
    _
  // Predicated region
  $region30: #{rnn_forward.1} parent=0 // pred_check
    _
  $region31: #{rnn_forward.1} parent=0 // pred_check_branch
    %350 = sbr.rel (0) target = $region33
  $region32: #{rnn_forward.1} parent=0 // pred_region
    _
  $region33: #{rnn_forward.1} parent=0 // pred_fallthru
    _
  // Predicated region
  $region34: #{rnn_forward.1} parent=0 // pred_check
    _
  $region35: #{rnn_forward.1} parent=0 // pred_check_branch
    %352 = sbr.rel (0) target = $region37
  $region36: #{rnn_forward.1} parent=0 // pred_region
    _
  $region37: #{rnn_forward.1} parent=0 // pred_fallthru
    _
  // Predicated region
  $region38: #{rnn_forward.1} parent=0 // pred_check
    _
  $region39: #{rnn_forward.1} parent=0 // pred_check_branch
    %354 = sbr.rel (0) target = $region41
  $region40: #{rnn_forward.1} parent=0 // pred_region
    _
  $region41: #{rnn_forward.1} parent=0 // pred_fallthru
    _

</llo_original>
